<compile_context>
chip_gen: v7x
topology: tpu7x:2x2x1
jax: 0.10.0
libtpu: 0.0.40
codegen_flags: <defaults>
</compile_context>

<pallas_src>
import functools

import jax
import jax.numpy as jnp
from jax.experimental import pallas as pl
from jax.experimental.pallas import tpu as pltpu


def _ce_partial_kernel(logits_ref, labels_ref, out_ref, *, n_rows, tile_n):
    """One row-tile: writes sum_i logp[i, label_i] for this tile into out_ref."""
    i = pl.program_id(0)

    x = logits_ref[...].astype(jnp.float32)             # (C, TN), classes on sublanes
    c, t = x.shape
    labels = labels_ref[...]                             # (1, TN) int32

    # Numerically stable log-softmax pieces along the class (sublane) axis.
    m = jnp.max(x, axis=0, keepdims=True)                # (1, TN)
    shifted = x - m                                      # (C, TN), <= 0
    denom = jnp.sum(jnp.exp(shifted), axis=0, keepdims=True)   # (1, TN)

    # Pick shifted[label[col], col] with a one-hot mask (no dynamic gather).
    class_id = jax.lax.broadcasted_iota(jnp.int32, (c, t), 0)  # (C, TN)
    picked_shift = jnp.sum(
        jnp.where(class_id == labels, shifted, 0.0), axis=0, keepdims=True)
    picked = picked_shift - jnp.log(denom)               # (1, TN) true-class log-prob

    # Mask columns past the true number of rows (ragged last tile / padding).
    col = jax.lax.broadcasted_iota(jnp.int32, (1, t), 1) + i * tile_n
    out_ref[0, 0] = jnp.sum(jnp.where(col < n_rows, picked, 0.0))


def my_cross_entropy_loss(y_preds, y_true, *, tile_n=2048):
    """JAX/Pallas equivalent of MyCrossEntropyLoss.forward."""
    y_pred = y_preds[1]
    c = y_pred.shape[-1]
    logits = y_pred.reshape(-1, c)                       # (N, C), native dtype
    n = logits.shape[0]

    # Lane-dense layout: rows -> 128-lane axis, classes -> sublanes.
    logits_t = logits.T                                  # (C, N)
    labels = y_true.reshape(1, -1).astype(jnp.int32)     # (1, N)

    # Tile size along the row/lane axis: full extent if small, else a
    # multiple of 128 to satisfy the lane-tiling constraint.
    if n <= tile_n:
        tn = n
    else:
        tn = max((tile_n // 128) * 128, 128)
    num_tiles = pl.cdiv(n, tn)

    kernel = functools.partial(_ce_partial_kernel, n_rows=n, tile_n=tn)

    partial = pl.pallas_call(
        kernel,
        out_shape=jax.ShapeDtypeStruct((num_tiles, 1), jnp.float32),
        grid=(num_tiles,),
        in_specs=[
            pl.BlockSpec((c, tn), lambda i: (0, i)),     # logits tile (lane-dense N)
            pl.BlockSpec((1, tn), lambda i: (0, i)),     # labels tile (lane-dense)
        ],
        out_specs=pl.BlockSpec((1, 1), lambda i: (i, 0),
                               memory_space=pltpu.SMEM),  # per-tile partial sum
        compiler_params=pltpu.CompilerParams(
            # No cross-iteration state -> axis is truly parallel (2-TC split
            # on v7x; harmless serial loop on single-TC v5e/v6e).
            dimension_semantics=("parallel",),
        ),
    )(logits_t, labels)

    # Tiny finalize in XLA: combine num_tiles partial sums, normalize, abs.
    return jnp.abs(jnp.sum(partial) / jnp.float32(n))


def _reference_loss(y_preds, y_true):
    y_pred = y_preds[1]
    c = y_pred.shape[-1]
    logits = y_pred.reshape(-1, c).astype(jnp.float32)
    labels = y_true.reshape(-1).astype(jnp.int32)
    logp = jax.nn.log_softmax(logits, axis=-1)
    picked = logp[jnp.arange(logits.shape[0]), labels]
    return jnp.abs(jnp.sum(picked) / logits.shape[0])


if __name__ == "__main__":
    key = jax.random.PRNGKey(0)
    k0, k1, k2, k3, k4 = jax.random.split(key, 5)

    # Test 1: small sentiment-like shapes (batch=2, seq=8, C=32), f32 logits.
    batch, seq, num_classes = 2, 8, 32
    dummy_pooled = jax.random.normal(k0, (batch, seq, num_classes), dtype=jnp.float32)
    logits3d = jax.random.normal(k1, (batch, seq, num_classes), dtype=jnp.float32)
    y_preds = (dummy_pooled, logits3d)
    y_true = jax.random.randint(k2, (batch, seq), 0, num_classes, dtype=jnp.int32)

    loss = jax.block_until_ready(my_cross_entropy_loss(y_preds, y_true))
    ref = _reference_loss(y_preds, y_true)
    assert jnp.allclose(loss, ref, rtol=1e-5, atol=1e-5), (loss, ref)

    # Test 2: bf16 logits on the wire, tiny class count (C=3), ragged row
    # count (N=300, not a multiple of the 128-row tile) -> exercises
    # multi-tile partial sums, last-tile masking, and native-dtype DMA.
    n2, c2 = 300, 3
    logits2 = jax.random.normal(k3, (n2, c2), dtype=jnp.bfloat16)
    labels2 = jax.random.randint(k4, (n2,), 0, c2, dtype=jnp.int32)
    y_preds2 = (logits2, logits2)   # module indexes [1]
    loss2 = jax.block_until_ready(
        my_cross_entropy_loss(y_preds2, labels2, tile_n=128))
    ref2 = _reference_loss(y_preds2, labels2)
    assert jnp.allclose(loss2, ref2, rtol=1e-4, atol=1e-4), (loss2, ref2)

    print("KERNEL_OK")
</pallas_src>

<mosaic_0001>
module attributes {stable_mosaic.version = 11 : i64} {
  func.func @_ce_partial_kernel(%arg0: i32, %arg1: memref<32x16xf32, #tpu.memory_space<vmem>>, %arg2: memref<1x16xi32, #tpu.memory_space<vmem>>, %arg3: memref<1x1xf32, #tpu.memory_space<smem>>) attributes {dimension_semantics = [#tpu.dimension_semantics<parallel>], iteration_bounds = array<i64: 1>, scalar_prefetch = 0 : i64, scratch_operands = 0 : i64, tpu.core_type = #tpu.core_type<tc>, window_params = [{transform_indices = @transform_0, window_bounds = array<i64: 32, 16>}, {transform_indices = @transform_1, window_bounds = array<i64: 1, 16>}, {transform_indices = @transform_2, window_bounds = array<i64: 1, 1>}]} {
    %c0 = arith.constant 0 : index
    %c0_0 = arith.constant 0 : index
    %0 = vector.load %arg1[%c0, %c0_0] : memref<32x16xf32, #tpu.memory_space<vmem>>, vector<32x16xf32>
    %c0_1 = arith.constant 0 : index
    %c0_2 = arith.constant 0 : index
    %1 = vector.load %arg2[%c0_1, %c0_2] : memref<1x16xi32, #tpu.memory_space<vmem>>, vector<1x16xi32>
    %cst = arith.constant dense<0xFF800000> : vector<16xf32>
    %2 = vector.multi_reduction <maximumf>, %0, %cst [0] : vector<32x16xf32> to vector<16xf32>
    %3 = vector.shape_cast %2 : vector<16xf32> to vector<1x16xf32>
    %4 = vector.broadcast %3 : vector<1x16xf32> to vector<32x16xf32>
    %5 = arith.subf %0, %4 : vector<32x16xf32>
    %6 = math.exp %5 : vector<32x16xf32>
    %cst_3 = arith.constant dense<0.000000e+00> : vector<16xf32>
    %7 = vector.multi_reduction <add>, %6, %cst_3 [0] : vector<32x16xf32> to vector<16xf32>
    %8 = vector.shape_cast %7 : vector<16xf32> to vector<1x16xf32>
    %9 = tpu.iota {dimensions = array<i32: 0>} : vector<32x16xi32>
    %10 = vector.broadcast %1 : vector<1x16xi32> to vector<32x16xi32>
    %11 = arith.cmpi eq, %9, %10 : vector<32x16xi32>
    %cst_4 = arith.constant 0.000000e+00 : f32
    %12 = vector.broadcast %cst_4 : f32 to vector<32x16xf32>
    %13 = arith.select %11, %5, %12 : vector<32x16xi1>, vector<32x16xf32>
    %cst_5 = arith.constant dense<0.000000e+00> : vector<16xf32>
    %14 = vector.multi_reduction <add>, %13, %cst_5 [0] : vector<32x16xf32> to vector<16xf32>
    %15 = vector.shape_cast %14 : vector<16xf32> to vector<1x16xf32>
    %16 = math.log %8 : vector<1x16xf32>
    %17 = arith.subf %15, %16 : vector<1x16xf32>
    %18 = tpu.iota {dimensions = array<i32: 1>} : vector<1x16xi32>
    %c16_i32 = arith.constant 16 : i32
    %19 = arith.muli %arg0, %c16_i32 : i32
    %20 = vector.broadcast %19 : i32 to vector<1x16xi32>
    %21 = arith.addi %18, %20 : vector<1x16xi32>
    %c16_i32_6 = arith.constant 16 : i32
    %22 = vector.broadcast %c16_i32_6 : i32 to vector<1x16xi32>
    %23 = arith.cmpi slt, %21, %22 : vector<1x16xi32>
    %cst_7 = arith.constant 0.000000e+00 : f32
    %24 = vector.broadcast %cst_7 : f32 to vector<1x16xf32>
    %25 = arith.select %23, %17, %24 : vector<1x16xi1>, vector<1x16xf32>
    %26 = vector.shape_cast %25 : vector<1x16xf32> to vector<1x1x16xf32>
    %cst_8 = arith.constant dense<0.000000e+00> : vector<1xf32>
    %27 = vector.multi_reduction <add>, %26, %cst_8 [1, 2] : vector<1x1x16xf32> to vector<1xf32>
    %28 = vector.shape_cast %27 : vector<1xf32> to vector<1x1x1xf32>
    %29 = vector.extract %28[0, 0, 0] : f32 from vector<1x1x1xf32>
    %c0_9 = arith.constant 0 : index
    %c0_10 = arith.constant 0 : index
    %30 = memref.load %arg3[%c0_9, %c0_10] : memref<1x1xf32, #tpu.memory_space<smem>>
    memref.store %29, %arg3[%c0_9, %c0_10] : memref<1x1xf32, #tpu.memory_space<smem>>
    return
  }
  func.func @transform_0(%arg0: i32) -> (i32, i32) {
    %c0_i32 = arith.constant 0 : i32
    %c0_i32_0 = arith.constant 0 : i32
    return %c0_i32, %arg0 : i32, i32
  }
  func.func @transform_1(%arg0: i32) -> (i32, i32) {
    %c0_i32 = arith.constant 0 : i32
    %c0_i32_0 = arith.constant 0 : i32
    return %c0_i32, %arg0 : i32, i32
  }
  func.func @transform_2(%arg0: i32) -> (i32, i32) {
    %c0_i32 = arith.constant 0 : i32
    %c0_i32_0 = arith.constant 0 : i32
    return %arg0, %c0_i32 : i32, i32
  }
}

</mosaic_0001>

<llo_original>
// kernel: tpu_custom_call.1
$region0: #{tpu_custom_call.1}
  #allocation0 [shape = 'u32[]', space=smem, size = 0x4, offset = 0x4, fixed_abs, tag = 'smem constant byte address 0x4 - core index']
  #allocation1 [shape = 'u32[144,128]{1,0:T(1,128)}', space=vmem, size = 0x12000, scoped, tag = 'internal scratch']
  %s0 = inlined_call_operand.vmem [shape: f32[32,16], index: 0, kind: input, shape index: {}]
  %s1 = inlined_call_operand.vmem [shape: s32[1,16], index: 1, kind: input, shape index: {}]
  %s2 = inlined_call_operand.hbm [shape: f32[1,1], index: 2, kind: output, shape index: {}]
  %s3 = sld [smem:[#allocation0]]
  $region18: #{tpu_custom_call.1} parent=0
    _
  %s5 = ssub.s32 1, %s3
  %s6 = scalar_select 0, %s5, %s3
  $region1: #{tpu_custom_call.1} parent=0
    #allocation2 [shape = 'u8[512]{0}', space=smem, size = 0x200, scoped, tag = 'output window, operand 0, single buffered']
    #allocation3 [shape = 's32[1]{0}', space=sflag, size = 0x4, scoped, tag = 'scoped memory for tpu_custom_call.1']
    %7 = vsyncpa [#allocation3], 0
    // Predicated region
    $region2: #{tpu_custom_call.1} parent=1 // pred_check
      _
    $region3: #{tpu_custom_call.1} parent=1 // pred_check_branch
      %9 = sbr.rel (0) target = $region5
    $region4: #{tpu_custom_call.1} parent=1 // pred_region
      _
    $region5: #{tpu_custom_call.1} parent=1 // pred_fallthru
      _
    // Predicated region
    $region6: #{tpu_custom_call.1} parent=1 // pred_check
      _
    $region7: #{tpu_custom_call.1} parent=1 // pred_check_branch
      %11 = sbr.rel (0) target = $region9
    $region8: #{tpu_custom_call.1} parent=1 // pred_region
      _
    $region9: #{tpu_custom_call.1} parent=1 // pred_fallthru
      _
    %v12 = vld [vmem:[%s0] sm:$0xff]
    %v13 = vld [vmem:[%s0 + $0x8] sm:$0xff]
    %v14 = vld [vmem:[%s0 + $0x10] sm:$0xff]
    %v15 = vld [vmem:[%s0 + $0x18] sm:$0xff]
    %v16 = vld [vmem:[%s1] sm:$0x1]
    %vm17 = vcmask 130048
    %v18 = vsel %vm17, %v12, -inf
    %v19 = vsel %vm17, %v13, -inf
    %v20 = vsel %vm17, %v14, -inf
    %v21 = vsel %vm17, %v15, -inf
    %v22 = vmax.f32 %v18, %v19
    %v23 = vmax.f32 %v20, %v21
    %v24 = vmax.f32 %v22, %v23
    %v25 = vrot.slane %v24, 4
    %v26 = vmax.f32 %v24, %v25
    %v27 = vrot.slane %v26, 2
    %v28 = vmax.f32 %v26, %v27
    %v29 = vrot.slane %v28, 1
    %v30 = vmax.f32 %v28, %v29
    %v31 = vsub.f32 %v12, %v30
    %v32 = vsub.f32 %v13, %v30
    %v33 = vsub.f32 %v14, %v30
    %v34 = vsub.f32 %v15, %v30
    %v35 = vmul.f32 %v31, 1.442695
    %v36 = vpow.pop %v35
    %v37 = vmul.f32 %v32, 1.442695
    %v38 = vpow.pop %v37
    %v39 = vmul.f32 %v33, 1.442695
    %v40 = vpow.pop %v39
    %v41 = vmul.f32 %v34, 1.442695
    %v42 = vpow.pop %v41
    %v43 = vsel %vm17, %v36, 0.0
    %v44 = vsel %vm17, %v38, 0.0
    %v45 = vadd.f32 %v43, %v44
    %v46 = vsel %vm17, %v40, 0.0
    %v47 = vadd.f32 %v45, %v46
    %v48 = vsel %vm17, %v42, 0.0
    %v49 = vadd.f32 %v47, %v48
    %v50 = vrot.slane %v49, 4
    %v51 = vadd.f32 %v49, %v50
    %v52 = vrot.slane %v51, 2
    %v53 = vadd.f32 %v51, %v52
    %v54 = vrot.slane %v53, 1
    %v55 = vadd.f32 %v53, %v54
    %v56 = vlaneseq
    %v57 = vshrl.u32 %v56, 7
    %v58 = vadd.s32 %v57, 8
    %v59 = vadd.s32 %v57, 16
    %v60 = vadd.s32 %v57, 24
    %v61 = vlaneseq
    %v62 = vshrl.u32 %v61, 7
    %v63 = vsub.s32 0, %v62
    %v64 = vrot.slane %v16, %v63
    %vm65 = vcmp.eq.s32.totalorder %v57, %v64
    %vm66 = vcmp.eq.s32.totalorder %v58, %v64
    %vm67 = vcmp.eq.s32.totalorder %v59, %v64
    %vm68 = vcmp.eq.s32.totalorder %v60, %v64
    %v69 = vsel %vm65, %v31, 0.0
    %v70 = vsel %vm66, %v32, 0.0
    %v71 = vsel %vm67, %v33, 0.0
    %v72 = vsel %vm68, %v34, 0.0
    %v73 = vsel %vm17, %v69, 0.0
    %v74 = vsel %vm17, %v70, 0.0
    %v75 = vadd.f32 %v73, %v74
    %v76 = vsel %vm17, %v71, 0.0
    %v77 = vadd.f32 %v75, %v76
    %v78 = vsel %vm17, %v72, 0.0
    %v79 = vadd.f32 %v77, %v78
    %v80 = vrot.slane %v79, 4
    %v81 = vadd.f32 %v79, %v80
    %v82 = vrot.slane %v81, 2
    %v83 = vadd.f32 %v81, %v82
    %v84 = vrot.slane %v83, 1
    %v85 = vadd.f32 %v83, %v84
    %v86 = vlog2.pop %v55
    %v87 = vmul.f32 %v86, 0.6931472
    %v88 = vsub.f32 %v85, %v87
    %v89 = vlaneseq
    %v90 = vand.u32 %v89, 127
    %s91 = smul.u32 0, 16
    %v92 = vstv %s91
    %v93 = vadd.s32 %v90, %v92
    %vm94 = vcmp.lt.s32.totalorder %v93, 16
    %v95 = vsel %vm94, %v88, 0.0
    %vm96 = vcmask 122880
    %v97 = vsel %vm96, %v95, 0.0
    %98 = vadd.xlane.f32.xlu0 %v97
    %v99 = vpop.xlane.xlu0 %98
    %v100 = vrot.slane %v99, 4
    %v101 = vadd.f32 %v99, %v100
    %v102 = vrot.slane %v101, 2
    %v103 = vadd.f32 %v101, %v102
    %v104 = vrot.slane %v103, 1
    %v105 = vadd.f32 %v103, %v104
    %s106 = vtos %v105
    %s107 = scalar_lea.smem [#allocation2], 0
    %108 = sst [smem:[%s107]] %s106
    // Predicated region
    $region10: #{tpu_custom_call.1} parent=1 // pred_check
      _
    $region11: #{tpu_custom_call.1} parent=1 // pred_check_branch
      %110 = sbr.rel (0) target = $region13
    $region12: #{tpu_custom_call.1} parent=1 // pred_region
      %s112 = ssub.s32 16, 16
      %113 = vsyncadd [#allocation3], %s112
      %116 = dma.smem_to_hbm [#allocation2], 16, %s2, [#allocation3]
    $region13: #{tpu_custom_call.1} parent=1 // pred_fallthru
      _
    // Predicated region
    $region14: #{tpu_custom_call.1} parent=1 // pred_check
      _
    $region15: #{tpu_custom_call.1} parent=1 // pred_check_branch
      %118 = sbr.rel (0) target = $region17
    $region16: #{tpu_custom_call.1} parent=1 // pred_region
      %119 = dma.done [#allocation3], 16
    $region17: #{tpu_custom_call.1} parent=1 // pred_fallthru
      _
    %120 = sfence
    %121 = vsyncpa [#allocation3], 1

</llo_original>
